<compile_context>
chip_gen: v5e
topology: v5e:2x2
jax: 0.10.0
libtpu: 0.0.40
codegen_flags: <defaults>
</compile_context>

<pallas_src>
import jax
import jax.numpy as jnp
from jax.experimental import pallas as pl
from jax.experimental.pallas import tpu as pltpu


def _mlp_softmax_kernel(x_ref, w1_ref, b1_ref, w2_ref, b2_ref, o_ref):
    # Transposed ("batch-on-lanes") layout: every column is an independent example,
    # so the ragged last block's garbage lanes never contaminate valid columns.
    w1 = w1_ref[...]                                   # (H, F)
    w2 = w2_ref[...]                                   # (O, H)
    x = x_ref[...].astype(w1.dtype)                    # (F, TB); in-register cast (no-op for f32)

    # Linear 1 + bias + ReLU (MXU, f32 accumulation).
    h = jnp.dot(w1, x, preferred_element_type=jnp.float32)            # (H, TB)
    h = jnp.maximum(h + b1_ref[...], 0.0)                             # b1: (H, 1) lane-broadcast

    # Linear 2 + bias.
    logits = jnp.dot(w2, h.astype(w2.dtype),
                     preferred_element_type=jnp.float32)              # (O, TB)
    logits = logits + b2_ref[...]                                     # b2: (O, 1)

    # Numerically stable softmax over the class axis (sublanes).  Exact divide:
    # the kernel is HBM-bound, so the divide is hidden under the DMA pipeline.
    m = jnp.max(logits, axis=0, keepdims=True)                        # (1, TB)
    e = jnp.exp(logits - m)
    denom = jnp.sum(e, axis=0, keepdims=True)
    o_ref[...] = (e / denom).astype(o_ref.dtype)                      # lane-dense (O, TB) store


def _tile_bytes(rows, cols, itemsize=4):
    """f32 VMEM footprint of a (rows, cols) block padded to (8, 128) vreg tiles."""
    return ((rows + 7) // 8) * 8 * ((cols + 127) // 128) * 128 * itemsize


def _default_vmem_limit(tb, n_in, n_hidden, n_out):
    resident = (_tile_bytes(n_hidden, n_in) + _tile_bytes(n_hidden, 1)
                + _tile_bytes(n_out, n_hidden) + _tile_bytes(n_out, 1))
    streamed = _tile_bytes(n_in, tb) + _tile_bytes(n_out, tb)          # x block + out block
    interm = 2 * _tile_bytes(n_hidden, tb) + 3 * _tile_bytes(n_out, tb)  # h / logits / exp temps
    need = 2 * (resident + streamed) + interm                          # x2: double-buffered pipeline
    # 2x margin, floor 16 MiB, cap at v7x's 64 MiB physical VMEM.
    return int(min(64 * 1024 * 1024, max(16 * 1024 * 1024, 2 * need)))


def survival_predictor_forward(x_t, w1, b1, w2, b2, *,
                               block_cols=8192,
                               compute_dtype=None,
                               vmem_limit_bytes=None):
    """Forward pass of SurvivalPredictorPerceptron in batch-on-lanes layout.

    x_t: (F, B)  input activations, batch on the lane (last) axis
    w1 : (H, F)  first Linear weight  (PyTorch nn.Linear layout: (out, in))
    b1 : (H,)
    w2 : (O, H)  second Linear weight
    b2 : (O,)
    Returns (O, B) class probabilities (softmax over axis 0).
    """
    n_in, batch = x_t.shape
    n_hidden, n_in2 = w1.shape
    n_out, n_hidden2 = w2.shape
    assert n_in == n_in2 and n_hidden == n_hidden2

    if compute_dtype is not None:
        # Only the tiny resident weights are cast here (<3 KiB); x stays as-is in
        # HBM and is cast in-register inside the kernel (no extra XLA pass over x).
        w1 = w1.astype(compute_dtype)
        w2 = w2.astype(compute_dtype)
    # Biases stay f32: they are added to the f32-accumulated matmul results.
    b1_2d = b1.astype(jnp.float32).reshape(n_hidden, 1)
    b2_2d = b2.astype(jnp.float32).reshape(n_out, 1)

    # Batch tile on the lane axis: whole batch in one step when it fits, otherwise
    # a large multiple of 128 (lane-dense, amortizes per-grid-step overhead).
    if batch <= block_cols:
        tb = batch
    else:
        tb = max((block_cols // 128) * 128, 128)
    grid = (pl.cdiv(batch, tb),)
    # No jnp.pad / out[:B] slice: Pallas masks the ragged last block's OOB lanes.

    if vmem_limit_bytes is None:
        vmem_limit_bytes = _default_vmem_limit(tb, n_in, n_hidden, n_out)

    return pl.pallas_call(
        _mlp_softmax_kernel,
        out_shape=jax.ShapeDtypeStruct((n_out, batch), jnp.float32),
        grid=grid,
        in_specs=[
            pl.BlockSpec((n_in, tb), lambda i: (0, i)),        # x: batch-tiled on lanes
            pl.BlockSpec((n_hidden, n_in), lambda i: (0, 0)),  # w1: VMEM-resident
            pl.BlockSpec((n_hidden, 1), lambda i: (0, 0)),     # b1: VMEM-resident
            pl.BlockSpec((n_out, n_hidden), lambda i: (0, 0)),  # w2: VMEM-resident
            pl.BlockSpec((n_out, 1), lambda i: (0, 0)),        # b2: VMEM-resident
        ],
        out_specs=pl.BlockSpec((n_out, tb), lambda i: (0, i)),
        compiler_params=pltpu.CompilerParams(
            dimension_semantics=("parallel",),   # shard batch tiles across TCs (v7x)
            vmem_limit_bytes=vmem_limit_bytes,
        ),
    )(x_t, w1, b1_2d, w2, b2_2d)


if __name__ == "__main__":
    # Sizes consistent with the module: Linear(16 -> 32) -> ReLU -> Linear(32 -> 4) -> Softmax.
    input_size, hidden_size, output_size = 16, 32, 4

    key = jax.random.PRNGKey(0)
    kx, kxb, kw1, kb1, kw2, kb2 = jax.random.split(key, 6)

    # PyTorch nn.Linear layout: weight (out_features, in_features), bias (out_features,).
    bound1 = 1.0 / (input_size ** 0.5)
    w1 = jax.random.uniform(kw1, (hidden_size, input_size), jnp.float32, -bound1, bound1)
    b1 = jax.random.uniform(kb1, (hidden_size,), jnp.float32, -bound1, bound1)
    bound2 = 1.0 / (hidden_size ** 0.5)
    w2 = jax.random.uniform(kw2, (output_size, hidden_size), jnp.float32, -bound2, bound2)
    b2 = jax.random.uniform(kb2, (output_size,), jnp.float32, -bound2, bound2)

    def reference(x):  # x: (B, F), PyTorch semantics
        h = jnp.maximum(x @ w1.T + b1, 0.0)
        return jax.nn.softmax(h @ w2.T + b2, axis=-1)

    # --- 1) Module-sized small batch (single grid step). ---
    batch = 8
    x = jax.random.normal(kx, (batch, input_size), dtype=jnp.float32)
    out_t = jax.block_until_ready(survival_predictor_forward(x.T, w1, b1, w2, b2))
    out = out_t.T                                   # back to (B, O) for comparison
    ref = reference(x)
    assert out.shape == (batch, output_size)
    assert jnp.allclose(out, ref, atol=1e-2), "small-batch mismatch vs reference"
    assert jnp.allclose(jnp.sum(out, axis=-1), jnp.ones((batch,)), atol=1e-5)

    # --- 2) Ragged larger batch: 3 grid steps, partial last block, no wrapper pad. ---
    big = 1030
    xb = jax.random.normal(kxb, (big, input_size), dtype=jnp.float32)
    out_big_t = jax.block_until_ready(
        survival_predictor_forward(xb.T, w1, b1, w2, b2, block_cols=512))
    out_big = out_big_t.T
    ref_big = reference(xb)
    assert out_big.shape == (big, output_size)
    assert jnp.allclose(out_big, ref_big, atol=1e-2), "ragged-batch mismatch vs reference"
    assert jnp.allclose(jnp.sum(out_big, axis=-1), jnp.ones((big,)), atol=1e-5)

    print("KERNEL_OK")
</pallas_src>

<mosaic_0001>
module attributes {stable_mosaic.version = 11 : i64} {
  func.func @_mlp_softmax_kernel(%arg0: i32, %arg1: memref<16x8xf32, #tpu.memory_space<vmem>>, %arg2: memref<32x16xf32, #tpu.memory_space<vmem>>, %arg3: memref<32x1xf32, #tpu.memory_space<vmem>>, %arg4: memref<4x32xf32, #tpu.memory_space<vmem>>, %arg5: memref<4x1xf32, #tpu.memory_space<vmem>>, %arg6: memref<4x8xf32, #tpu.memory_space<vmem>>) attributes {dimension_semantics = [#tpu.dimension_semantics<parallel>], iteration_bounds = array<i64: 1>, scalar_prefetch = 0 : i64, scratch_operands = 0 : i64, tpu.core_type = #tpu.core_type<tc>, window_params = [{transform_indices = @transform_0, window_bounds = array<i64: 16, 8>}, {pipeline_mode = #tpu.pipeline_mode<synchronous>, transform_indices = @transform_1, window_bounds = array<i64: 32, 16>}, {pipeline_mode = #tpu.pipeline_mode<synchronous>, transform_indices = @transform_2, window_bounds = array<i64: 32, 1>}, {pipeline_mode = #tpu.pipeline_mode<synchronous>, transform_indices = @transform_3, window_bounds = array<i64: 4, 32>}, {pipeline_mode = #tpu.pipeline_mode<synchronous>, transform_indices = @transform_4, window_bounds = array<i64: 4, 1>}, {transform_indices = @transform_5, window_bounds = array<i64: 4, 8>}]} {
    %c0 = arith.constant 0 : index
    %c0_0 = arith.constant 0 : index
    %0 = vector.load %arg2[%c0, %c0_0] : memref<32x16xf32, #tpu.memory_space<vmem>>, vector<32x16xf32>
    %c0_1 = arith.constant 0 : index
    %c0_2 = arith.constant 0 : index
    %1 = vector.load %arg4[%c0_1, %c0_2] : memref<4x32xf32, #tpu.memory_space<vmem>>, vector<4x32xf32>
    %c0_3 = arith.constant 0 : index
    %c0_4 = arith.constant 0 : index
    %2 = vector.load %arg1[%c0_3, %c0_4] : memref<16x8xf32, #tpu.memory_space<vmem>>, vector<16x8xf32>
    %cst = arith.constant dense<0.000000e+00> : vector<32x8xf32>
    %3 = tpu.matmul %0, %2, %cst {dimension_numbers = #tpu.dot_dimension_numbers<[1], [0], [0], [1], [0, 0, 1, 1], [], []>} : vector<32x16xf32>, vector<16x8xf32>, vector<32x8xf32> -> vector<32x8xf32>
    %c0_5 = arith.constant 0 : index
    %c0_6 = arith.constant 0 : index
    %4 = vector.load %arg3[%c0_5, %c0_6] : memref<32x1xf32, #tpu.memory_space<vmem>>, vector<32x1xf32>
    %5 = vector.broadcast %4 : vector<32x1xf32> to vector<32x8xf32>
    %6 = arith.addf %3, %5 : vector<32x8xf32>
    %cst_7 = arith.constant 0.000000e+00 : f32
    %7 = vector.broadcast %cst_7 : f32 to vector<32x8xf32>
    %8 = arith.maximumf %6, %7 : vector<32x8xf32>
    %cst_8 = arith.constant dense<0.000000e+00> : vector<4x8xf32>
    %9 = tpu.matmul %1, %8, %cst_8 {dimension_numbers = #tpu.dot_dimension_numbers<[1], [0], [0], [1], [0, 0, 1, 1], [], []>} : vector<4x32xf32>, vector<32x8xf32>, vector<4x8xf32> -> vector<4x8xf32>
    %c0_9 = arith.constant 0 : index
    %c0_10 = arith.constant 0 : index
    %10 = vector.load %arg5[%c0_9, %c0_10] : memref<4x1xf32, #tpu.memory_space<vmem>>, vector<4x1xf32>
    %11 = vector.broadcast %10 : vector<4x1xf32> to vector<4x8xf32>
    %12 = arith.addf %9, %11 : vector<4x8xf32>
    %cst_11 = arith.constant dense<0xFF800000> : vector<8xf32>
    %13 = vector.multi_reduction <maximumf>, %12, %cst_11 [0] : vector<4x8xf32> to vector<8xf32>
    %14 = vector.shape_cast %13 : vector<8xf32> to vector<1x8xf32>
    %15 = vector.broadcast %14 : vector<1x8xf32> to vector<4x8xf32>
    %16 = arith.subf %12, %15 : vector<4x8xf32>
    %17 = math.exp %16 : vector<4x8xf32>
    %cst_12 = arith.constant dense<0.000000e+00> : vector<8xf32>
    %18 = vector.multi_reduction <add>, %17, %cst_12 [0] : vector<4x8xf32> to vector<8xf32>
    %19 = vector.shape_cast %18 : vector<8xf32> to vector<1x8xf32>
    %20 = vector.broadcast %19 : vector<1x8xf32> to vector<4x8xf32>
    %21 = arith.divf %17, %20 : vector<4x8xf32>
    %c0_13 = arith.constant 0 : index
    %c0_14 = arith.constant 0 : index
    %22 = vector.load %arg6[%c0_13, %c0_14] : memref<4x8xf32, #tpu.memory_space<vmem>>, vector<4x8xf32>
    tpu.vector_store %arg6[%c0_13, %c0_14], %21 {strides = array<i32>} : memref<4x8xf32, #tpu.memory_space<vmem>>, vector<4x8xf32>,
    return
  }
  func.func @transform_0(%arg0: i32) -> (i32, i32) {
    %c0_i32 = arith.constant 0 : i32
    %c0_i32_0 = arith.constant 0 : i32
    return %c0_i32, %arg0 : i32, i32
  }
  func.func @transform_1(%arg0: i32) -> (i32, i32) {
    %c0_i32 = arith.constant 0 : i32
    %c0_i32_0 = arith.constant 0 : i32
    %c0_i32_1 = arith.constant 0 : i32
    return %c0_i32, %c0_i32_0 : i32, i32
  }
  func.func @transform_2(%arg0: i32) -> (i32, i32) {
    %c0_i32 = arith.constant 0 : i32
    %c0_i32_0 = arith.constant 0 : i32
    %c0_i32_1 = arith.constant 0 : i32
    return %c0_i32, %c0_i32_0 : i32, i32
  }
  func.func @transform_3(%arg0: i32) -> (i32, i32) {
    %c0_i32 = arith.constant 0 : i32
    %c0_i32_0 = arith.constant 0 : i32
    %c0_i32_1 = arith.constant 0 : i32
    return %c0_i32, %c0_i32_0 : i32, i32
  }
  func.func @transform_4(%arg0: i32) -> (i32, i32) {
    %c0_i32 = arith.constant 0 : i32
    %c0_i32_0 = arith.constant 0 : i32
    %c0_i32_1 = arith.constant 0 : i32
    return %c0_i32, %c0_i32_0 : i32, i32
  }
  func.func @transform_5(%arg0: i32) -> (i32, i32) {
    %c0_i32 = arith.constant 0 : i32
    %c0_i32_0 = arith.constant 0 : i32
    return %c0_i32, %arg0 : i32, i32
  }
}

</mosaic_0001>

<llo_original>
// kernel: tpu_custom_call.1
$region0: #{tpu_custom_call.1}
  #allocation0 [shape = 'u32[]', space=smem, size = 0x4, offset = 0x4, fixed_abs, tag = 'smem constant byte address 0x4 - core index']
  #allocation1 [shape = 'u32[72,128]{1,0:T(1,128)}', space=vmem, size = 0x9000, scoped, tag = 'internal scratch']
  %s0 = inlined_call_operand.vmem [shape: f32[16,8], index: 0, kind: input, shape index: {}]
  %s1 = inlined_call_operand.vmem [shape: f32[32,16], index: 1, kind: input, shape index: {}]
  %s2 = inlined_call_operand.vmem [shape: f32[32,1], index: 2, kind: input, shape index: {}]
  %s3 = inlined_call_operand.vmem [shape: f32[4,32], index: 3, kind: input, shape index: {}]
  %s4 = inlined_call_operand.vmem [shape: f32[4,1], index: 4, kind: input, shape index: {}]
  %s5 = inlined_call_operand.hbm [shape: f32[4,8], index: 5, kind: output, shape index: {}]
  %s6 = sld [smem:[#allocation0]]
  $region30: #{tpu_custom_call.1} parent=0
    _
  %s8 = ssub.s32 1, %s6
  %s9 = scalar_select 0, %s8, %s6
  $region1: #{tpu_custom_call.1} parent=0
    #allocation2 [shape = 'u8[2048]{0}', space=vmem, size = 0x800, scoped, tag = 'output window, operand 0, single buffered']
    #allocation3 [shape = 's32[1]{0}', space=sflag, size = 0x4, scoped, tag = 'scoped memory for tpu_custom_call.1']
    %10 = vsyncpa [#allocation3], 0
    // Predicated region
    $region2: #{tpu_custom_call.1} parent=1 // pred_check
      _
    $region3: #{tpu_custom_call.1} parent=1 // pred_check_branch
      %12 = sbr.rel (0) target = $region5
    $region4: #{tpu_custom_call.1} parent=1 // pred_region
      _
    $region5: #{tpu_custom_call.1} parent=1 // pred_fallthru
      _
    // Predicated region
    $region6: #{tpu_custom_call.1} parent=1 // pred_check
      _
    $region7: #{tpu_custom_call.1} parent=1 // pred_check_branch
      %14 = sbr.rel (0) target = $region9
    $region8: #{tpu_custom_call.1} parent=1 // pred_region
      _
    $region9: #{tpu_custom_call.1} parent=1 // pred_fallthru
      _
    // Predicated region
    $region10: #{tpu_custom_call.1} parent=1 // pred_check
      _
    $region11: #{tpu_custom_call.1} parent=1 // pred_check_branch
      %16 = sbr.rel (0) target = $region13
    $region12: #{tpu_custom_call.1} parent=1 // pred_region
      _
    $region13: #{tpu_custom_call.1} parent=1 // pred_fallthru
      _
    // Predicated region
    $region14: #{tpu_custom_call.1} parent=1 // pred_check
      _
    $region15: #{tpu_custom_call.1} parent=1 // pred_check_branch
      %18 = sbr.rel (0) target = $region17
    $region16: #{tpu_custom_call.1} parent=1 // pred_region
      _
    $region17: #{tpu_custom_call.1} parent=1 // pred_fallthru
      _
    // Predicated region
    $region18: #{tpu_custom_call.1} parent=1 // pred_check
      _
    $region19: #{tpu_custom_call.1} parent=1 // pred_check_branch
      %20 = sbr.rel (0) target = $region21
    $region20: #{tpu_custom_call.1} parent=1 // pred_region
      _
    $region21: #{tpu_custom_call.1} parent=1 // pred_fallthru
      _
    %v21 = vld [vmem:[%s1] sm:$0xff]
    %v22 = vld [vmem:[%s1 + $0x8] sm:$0xff]
    %v23 = vld [vmem:[%s1 + $0x10] sm:$0xff]
    %v24 = vld [vmem:[%s1 + $0x18] sm:$0xff]
    %v25 = vld [vmem:[%s3] sm:$0xf]
    %v26 = vld [vmem:[%s0] sm:$0xff]
    %v27 = vld [vmem:[%s0 + $0x8] sm:$0xff]
    %v28 = vld [vmem:[%s2] sm:$0xff]
    %v29 = vld [vmem:[%s2 + $0x8] sm:$0xff]
    %v30 = vld [vmem:[%s2 + $0x10] sm:$0xff]
    %v31 = vld [vmem:[%s2 + $0x18] sm:$0xff]
    %33 = vset.pattern.permute.xlu0 0
    %34 = vperm.xlu0 %33, %v28
    %v35 = vpop.permute.xlu0 %34
    %38 = vset.pattern.permute.xlu0 0
    %39 = vperm.xlu0 %38, %v29
    %v40 = vpop.permute.xlu0 %39
    %43 = vset.pattern.permute.xlu0 0
    %44 = vperm.xlu0 %43, %v30
    %v45 = vpop.permute.xlu0 %44
    %48 = vset.pattern.permute.xlu0 0
    %49 = vperm.xlu0 %48, %v31
    %v50 = vpop.permute.xlu0 %49
    %vm52 = vcmask 130048
    %v54 = vsel %vm52, %v21, 0
    %v57 = vsel %vm52, %v22, 0
    %v60 = vsel %vm52, %v23, 0
    %v63 = vsel %vm52, %v24, 0
    %65 = vmatpush.msra.mxu0 0.0
    %66 = vmatpush.msra.mxu0 0.0
    %67 = vmatpush.msra.mxu0 0.0
    %68 = vmatpush.msra.mxu0 0.0
    %69 = vmatpush.msra.mxu0 0.0
    %70 = vmatpush.msra.mxu0 0.0
    %71 = vmatpush.msra.mxu0 0.0
    %72 = vmatpush.msra.mxu0 0.0
    %73 = vmatpush.msra.mxu0 0.0
    %74 = vmatpush.msra.mxu0 0.0
    %75 = vmatpush.msra.mxu0 0.0
    %76 = vmatpush.msra.mxu0 0.0
    %77 = vmatpush.msra.mxu0 0.0
    %78 = vmatpush.msra.mxu0 0.0
    %79 = vmatpush.msra.mxu0 %v27
    %80 = vmatpush.msra.mxu0 %v26
    %81 = vmatmul.f32.gmra.mxu0 %v54
    %v82 = vpop.f32.mrf.mxu0
    %v83 = vadd.f32 %v35, %v82
    %84 = vmatmul.f32.gmra.mxu0 %v57
    %v85 = vpop.f32.mrf.mxu0
    %v86 = vadd.f32 %v40, %v85
    %87 = vmatmul.f32.gmra.mxu0 %v60
    %v88 = vpop.f32.mrf.mxu0
    %v89 = vadd.f32 %v45, %v88
    %90 = vmatmul.f32.gmra.mxu0 %v63
    %v91 = vpop.f32.mrf.mxu0
    %v92 = vadd.f32 %v50, %v91
    %93 = vdwg.mxu0
    %v94 = vmax.f32 %v83, 0.0
    %v95 = vmax.f32 %v86, 0.0
    %v96 = vmax.f32 %v89, 0.0
    %v97 = vmax.f32 %v92, 0.0
    %v98 = vld [vmem:[%s4] sm:$0xf]
    %100 = vset.pattern.permute.xlu0 0
    %101 = vperm.xlu0 %100, %v98
    %v102 = vpop.permute.xlu0 %101
    %vm104 = vcmask 261120
    %v106 = vsel %vm104, %v25, 0
    %108 = vmatpush.msra.mxu0 0.0
    %109 = vmatpush.msra.mxu0 0.0
    %110 = vmatpush.msra.mxu0 0.0
    %111 = vmatpush.msra.mxu0 0.0
    %112 = vmatpush.msra.mxu0 0.0
    %113 = vmatpush.msra.mxu0 0.0
    %114 = vmatpush.msra.mxu0 0.0
    %115 = vmatpush.msra.mxu0 0.0
    %116 = vmatpush.msra.mxu0 0.0
    %117 = vmatpush.msra.mxu0 0.0
    %118 = vmatpush.msra.mxu0 0.0
    %119 = vmatpush.msra.mxu0 0.0
    %120 = vmatpush.msra.mxu0 %v97
    %121 = vmatpush.msra.mxu0 %v96
    %122 = vmatpush.msra.mxu0 %v95
    %123 = vmatpush.msra.mxu0 %v94
    %124 = vmatmul.f32.gmra.mxu0 %v106
    %v125 = vpop.f32.mrf.mxu0
    %v126 = vadd.f32 %v102, %v125
    %127 = vdwg.mxu0
    %vm128 = vcmask 60416
    %v129 = vsel %vm128, %v126, -inf
    %v130 = vrot.slane %v129, 4
    %v131 = vmax.f32 %v129, %v130
    %v132 = vrot.slane %v131, 2
    %v133 = vmax.f32 %v131, %v132
    %v134 = vrot.slane %v133, 1
    %v135 = vmax.f32 %v133, %v134
    %v136 = vsub.f32 %v126, %v135
    %v137 = vmul.f32 %v136, 1.442695
    %v138 = vpow.pop %v137
    %v139 = vsel %vm128, %v138, 0.0
    %v140 = vrot.slane %v139, 4
    %v141 = vadd.f32 %v139, %v140
    %v142 = vrot.slane %v141, 2
    %v143 = vadd.f32 %v141, %v142
    %v144 = vrot.slane %v143, 1
    %v145 = vadd.f32 %v143, %v144
    %v146 = vrcp.pop %v145
    %v147 = vmul.f32 %v145, %v146
    %v148 = vsub.f32 1.0, %v147
    %v149 = vmul.f32 %v146, %v148
    %v150 = vadd.f32 %v146, %v149
    %vm151 = vweird.f32 %v145
    %vm152 = vweird.f32 %v146
    %vm153 = vmor %vm151, %vm152
    %v154 = vsel %vm153, %v146, %v150
    %v155 = vand.u32 2147483647, %v145
    %vm156 = vcmp.eq.f32.partialorder %v155, 8.507059e+37
    %v157 = vand.u32 %v145, 2147483648
    %v158 = vor.u32 1.1754944e-38, %v157
    %v159 = vsel %vm156, %v158, %v154
    %v160 = vmul.f32 %v138, %v159
    %161 = vst.msk [vmem:[#allocation2] sm:$0xf] %vm128, %v160
    // Predicated region
    $region22: #{tpu_custom_call.1} parent=1 // pred_check
      _
    $region23: #{tpu_custom_call.1} parent=1 // pred_check_branch
      %163 = sbr.rel (0) target = $region25
    $region24: #{tpu_custom_call.1} parent=1 // pred_region
      %165 = vsyncadd [#allocation3], 0
      %s167 = sshll.u32 [#allocation2], 4
      %s168 = int_to_ptr.vmem [resolvable:$true] %s167
      %s169 = sshll.u32 %s5, 4
      %s170 = int_to_ptr.hbm [resolvable:$true] %s169
      %172 = dma.vmem_to_hbm [thread:$0]  %s168, 64, %s170, [#allocation3]
    $region25: #{tpu_custom_call.1} parent=1 // pred_fallthru
      _
    // Predicated region
    $region26: #{tpu_custom_call.1} parent=1 // pred_check
      _
    $region27: #{tpu_custom_call.1} parent=1 // pred_check_branch
      %174 = sbr.rel (0) target = $region29
    $region28: #{tpu_custom_call.1} parent=1 // pred_region
      %176 = dma.done [#allocation3], 64
    $region29: #{tpu_custom_call.1} parent=1 // pred_fallthru
      _
    %177 = vsyncpa [#allocation3], 1

</llo_original>
